<compile_context>
chip_gen: v7x
topology: tpu7x:2x2x1
jax: 0.10.0
libtpu: 0.0.40
codegen_flags: <defaults>
</compile_context>

<pallas_src>
import functools

import jax
import jax.numpy as jnp
from jax.experimental import pallas as pl
from jax.experimental.pallas import tpu as pltpu


def _round_up(x, m):
    return (x + m - 1) // m * m


def _vmem_plan():
    """Generation-aware (tile_budget_bytes, vmem_limit_bytes)."""
    cap = 64 * 1024 * 1024
    try:
        info = pltpu.get_tpu_info()
        cap = int(getattr(info, "vmem_capacity_bytes", cap)) or cap
    except Exception:  # no TPU visible at trace time; stay conservative.
        pass
    budget = min(int(cap * 0.70), 96 * 1024 * 1024)   # tile plan
    limit = min(int(cap * 0.75), 100 * 1024 * 1024)   # scoped VMEM limit
    return budget, limit


def _tile_candidates(total, cap=8192):
    """Descending tile sizes: multiples of 128 that divide `total`."""
    cands = {total}
    d = 128
    while d <= min(total, cap):
        if total % d == 0:
            cands.add(d)
        d += 128
    h = total // 2
    while h > cap:
        if total % h == 0 and h % 128 == 0:
            cands.add(h)
        h //= 2
    return sorted(cands, reverse=True)


def _footprint(bm, bk, bn, in_bytes, out_bytes, needs_acc, w_bufs=2):
    # NOTE: the weight is counted double-buffered even when its index map is
    # constant (conservative; avoids ever overshooting the scoped VMEM limit).
    fp = (2 * bm * bk * in_bytes          # x blocks (double-buffered)
          + w_bufs * bk * bn * in_bytes   # W^T blocks
          + 2 * bm * bn * out_bytes)      # output blocks
    if needs_acc:
        fp += bm * bn * 4                 # f32 accumulator scratch
    return fp


def _choose_tiles(B, F_pad, O_pad, in_bytes, out_bytes, needs_acc, budget,
                  sublane):
    """Pick (bm, bk, bn) tiles that fit the VMEM budget."""
    bm = min(_round_up(max(B, 1), sublane), 512)
    k_cands = _tile_candidates(F_pad)
    n_cands = _tile_candidates(O_pad)

    def fits(bm_, bk_, bn_):
        return _footprint(bm_, bk_, bn_, in_bytes, out_bytes,
                          needs_acc) <= budget

    while True:
        # Prefer the largest K tile (fewest accumulator passes / weight
        # re-fetches; bk == F_pad keeps the reduction fully resident), then
        # the largest N tile that still fits.
        for bk in k_cands:
            for bn in n_cands:
                if fits(bm, bk, bn):
                    return bm, bk, bn
        if bm <= sublane:
            return sublane, 128, 128      # smallest legal tiles
        bm = max(sublane, (bm // 2 // sublane) * sublane)


# --------------------------------------------------------------------------
# Kernels
# --------------------------------------------------------------------------

def _sndense_kernel_f32(scale_ref, x_ref, wT_ref, o_ref):
    # f32 output: accumulate directly into the resident output block
    # (out index map ignores k), no scratch; fused 1/sigma on the last K step.
    k = pl.program_id(2)
    prod = jnp.dot(x_ref[...], wT_ref[...], preferred_element_type=jnp.float32)

    @pl.when(k == 0)
    def _():
        o_ref[...] = prod

    @pl.when(k > 0)
    def _():
        o_ref[...] = o_ref[...] + prod

    @pl.when(k == pl.num_programs(2) - 1)
    def _():
        o_ref[...] = o_ref[...] * scale_ref[0, 0]


def _sndense_kernel_acc(scale_ref, x_ref, wT_ref, o_ref, acc_ref):
    # sub-f32 output: f32 scratch accumulator; scale + cast on the last K step.
    k = pl.program_id(2)
    prod = jnp.dot(x_ref[...], wT_ref[...], preferred_element_type=jnp.float32)

    @pl.when(k == 0)
    def _():
        acc_ref[...] = prod

    @pl.when(k > 0)
    def _():
        acc_ref[...] = acc_ref[...] + prod

    @pl.when(k == pl.num_programs(2) - 1)
    def _():
        o_ref[...] = (acc_ref[...] * scale_ref[0, 0]).astype(o_ref.dtype)


def _sndense_kernel_single(scale_ref, x_ref, wT_ref, o_ref):
    # Small-problem fast path: whole problem is one VMEM-resident block.
    o_ref[...] = (jnp.dot(x_ref[...], wT_ref[...],
                          preferred_element_type=jnp.float32)
                  * scale_ref[0, 0]).astype(o_ref.dtype)


# --------------------------------------------------------------------------
# Wrapper
# --------------------------------------------------------------------------

def prepare_sndense_weight(weight, compute_dtype=None):
    """One-time weight prep: W [O, F] -> W^T zero-padded to [F_pad, O_pad].

    The result is a static parameter: store and reuse it across calls, so the
    transpose / pad / cast HBM passes are not paid on every forward.
    """
    O, F = weight.shape
    cd = weight.dtype if compute_dtype is None else jnp.dtype(compute_dtype)
    F_pad = _round_up(F, 128)
    O_pad = _round_up(O, 128)
    wT = weight.T
    if (F_pad, O_pad) != (F, O):
        wT = jnp.pad(wT, ((0, F_pad - F), (0, O_pad - O)))
    return wT.astype(cd)


@functools.partial(
    jax.jit, static_argnames=("out_features", "block_m", "block_n", "block_k"))
def sndense_forward(x, wT_pad, u, v=None, *, out_features,
                    block_m=None, block_n=None, block_k=None):
    """Spectral-norm Linear forward.

    x:      [B, F]          (F = in_channels * cube_size**3)
    wT_pad: [F_pad, O_pad]  from prepare_sndense_weight (static parameter)
    u:      [O]             power-iteration state; `v` accepted for API parity
                            only (PyTorch recomputes v from u each forward).
    Returns (y [B, O], u_new [O], v_new [F]).  Thread u_new back in on the next
    call to reproduce PyTorch's in-place buffer updates.
    """
    del v
    B, F = x.shape
    O = out_features
    F_pad, O_pad = wT_pad.shape
    cd = wT_pad.dtype
    out_dtype = x.dtype
    eps = 1e-12

    # --- spectral norm: one power-iteration step, directly on the prepared
    # (zero-padded) W^T in its native dtype with f32 accumulation.  The zero
    # padding does not change the result; sigma = ||W v|| reuses the norm
    # needed to normalize u (== u^T W v, up to eps). ---
    u_p = u if O_pad == O else jnp.pad(u, (0, O_pad - O))
    v_p = jnp.dot(wT_pad, u_p.astype(cd), preferred_element_type=jnp.float32)
    v_p = v_p / (jnp.linalg.norm(v_p) + eps)
    wv = jnp.dot(v_p.astype(cd), wT_pad, preferred_element_type=jnp.float32)
    sigma = jnp.linalg.norm(wv)
    u_p_new = wv / (sigma + eps)
    # NOTE: no epsilon guard on sigma itself -> parity with PyTorch.
    inv_sigma = (1.0 / sigma).reshape(1, 1).astype(jnp.float32)
    u_new = u_p_new[:O]
    v_new = v_p[:F]

    in_bytes = jnp.dtype(cd).itemsize
    out_bytes = jnp.dtype(out_dtype).itemsize
    needs_acc = out_dtype != jnp.float32
    sublane = 16 if in_bytes < 4 else 8        # bf16 packs 16 rows / vreg
    budget, vmem_limit = _vmem_plan()

    # --- small-problem fast path: single block, no grid / accumulator ---
    single_fp = (_round_up(B, sublane) * F_pad * in_bytes
                 + F_pad * O_pad * in_bytes
                 + _round_up(B, sublane) * O_pad * max(out_bytes, 4))
    if (block_m is None and block_n is None and block_k is None
            and single_fp <= min(budget, 8 * 1024 * 1024)):
        x_p = x
        if F_pad != F or x.dtype != cd:
            x_p = jnp.pad(x, ((0, 0), (0, F_pad - F))).astype(cd)
        out = pl.pallas_call(
            _sndense_kernel_single,
            out_shape=jax.ShapeDtypeStruct((B, O_pad), out_dtype),
            in_specs=[
                pl.BlockSpec(memory_space=pltpu.MemorySpace.SMEM),
                pl.BlockSpec(memory_space=pltpu.MemorySpace.VMEM),
                pl.BlockSpec(memory_space=pltpu.MemorySpace.VMEM),
            ],
            out_specs=pl.BlockSpec(memory_space=pltpu.MemorySpace.VMEM),
            compiler_params=pltpu.CompilerParams(vmem_limit_bytes=vmem_limit),
        )(inv_sigma, x_p, wT_pad)
        return out[:, :O], u_new, v_new

    # --- tile plan (lane-dense, VMEM-budgeted, M/N/K tiled) ---
    bm, bk, bn = _choose_tiles(B, F_pad, O_pad, in_bytes, out_bytes,
                               needs_acc, budget, sublane)
    if block_m is not None:
        if block_m % sublane:
            raise ValueError(f"block_m must be a multiple of {sublane}")
        bm = block_m
    if block_k is not None:
        if block_k % 128 or F_pad % block_k:
            raise ValueError("block_k must be a multiple of 128 dividing F_pad")
        bk = block_k
    if block_n is not None:
        if block_n % 128 or O_pad % block_n:
            raise ValueError("block_n must be a multiple of 128 dividing O_pad")
        bn = block_n

    B_pad = _round_up(B, bm)
    grid = (B_pad // bm, O_pad // bn, F_pad // bk)

    # Only pad / cast x when actually required (saves a full HBM pass of the
    # activation on aligned shapes).
    x_p = x
    if B_pad != B or F_pad != F or x.dtype != cd:
        x_p = jnp.pad(x, ((0, B_pad - B), (0, F_pad - F))).astype(cd)

    # Streamed-K weight stream: deepen the pipeline when the budget allows.
    wt_index_map = lambda i, j, k: (k, j)
    wt_spec = pl.BlockSpec((bk, bn), wt_index_map)
    if bk < F_pad and _footprint(bm, bk, bn, in_bytes, out_bytes, needs_acc,
                                 w_bufs=3) <= budget:
        try:
            wt_spec = pl.BlockSpec((bk, bn), wt_index_map,
                                   pipeline_mode=pl.Buffered(3))
        except (TypeError, AttributeError):
            wt_spec = pl.BlockSpec((bk, bn), wt_index_map)

    in_specs = [
        # 1/sigma scalar in SMEM (read on the last K step of each tile).
        pl.BlockSpec((1, 1), lambda i, j, k: (0, 0),
                     memory_space=pltpu.MemorySpace.SMEM),
        # x tile: rows i, K-chunk k.
        pl.BlockSpec((bm, bk), lambda i, j, k: (i, k)),
        # W^T tile: K-chunk k, N-chunk j.  With bk == F_pad and bn == O_pad the
        # index map is constant, so the weight is DMA'd only once.
        wt_spec,
    ]
    out_spec = pl.BlockSpec((bm, bn), lambda i, j, k: (i, j))

    kernel = _sndense_kernel_acc if needs_acc else _sndense_kernel_f32
    scratch = [pltpu.VMEM((bm, bn), jnp.float32)] if needs_acc else []

    out = pl.pallas_call(
        kernel,
        out_shape=jax.ShapeDtypeStruct((B_pad, O_pad), out_dtype),
        grid_spec=pltpu.PrefetchScalarGridSpec(
            num_scalar_prefetch=0,
            grid=grid,
            in_specs=in_specs,
            out_specs=out_spec,
            scratch_shapes=scratch,
        ),
        compiler_params=pltpu.CompilerParams(
            # M and N are both parallel so v7x's two TensorCores stay fed even
            # with a single M tile; K is the resident-output reduction.
            dimension_semantics=("parallel", "parallel", "arbitrary"),
            vmem_limit_bytes=vmem_limit,
        ),
    )(inv_sigma, x_p, wT_pad)

    return out[:B, :O], u_new, v_new


# --------------------------------------------------------------------------
# Self-test
# --------------------------------------------------------------------------

if __name__ == "__main__":
    # Module config (small): in_channels=4, cube_size=2 -> in_features = 32.
    in_channels, cube_size, out_channel = 4, 2, 32
    in_features = in_channels * cube_size ** 3
    batch = 8

    key = jax.random.PRNGKey(0)
    k_x, k_w, k_u, k_v = jax.random.split(key, 4)

    x = jax.random.normal(k_x, (batch, in_features), dtype=jnp.float32)
    weight = jax.random.normal(k_w, (out_channel, in_features),
                               dtype=jnp.float32) * 0.1
    u = jax.random.normal(k_u, (out_channel,), dtype=jnp.float32)
    u = u / (jnp.linalg.norm(u) + 1e-12)
    v = jax.random.normal(k_v, (in_features,), dtype=jnp.float32)
    v = v / (jnp.linalg.norm(v) + 1e-12)

    def reference(x_, w_, u_):
        eps = 1e-12
        v_r = w_.T @ u_
        v_r = v_r / (jnp.linalg.norm(v_r) + eps)
        u_r = w_ @ v_r
        u_r = u_r / (jnp.linalg.norm(u_r) + eps)
        sigma = u_r @ (w_ @ v_r)
        return x_ @ (w_ / sigma).T, u_r, v_r

    y_ref, u_ref, v_ref = reference(x, weight, u)

    # 1) Small-problem fast path (f32, PyTorch-parity numerics).
    wT32 = prepare_sndense_weight(weight)                      # one-time prep
    y32, u_new, v_new = sndense_forward(x, wT32, u, v,
                                        out_features=out_channel)
    jax.block_until_ready(y32)
    assert y32.shape == (batch, out_channel)
    assert jnp.allclose(y32, y_ref, atol=1e-5, rtol=1e-5)
    assert jnp.allclose(u_new, u_ref, atol=1e-5, rtol=1e-5)
    assert jnp.allclose(v_new, v_ref, atol=1e-5, rtol=1e-5)

    # 2) Fast path with bf16 compute operands (f32 accumulation).
    wT16 = prepare_sndense_weight(weight, compute_dtype=jnp.bfloat16)
    y16, _, _ = sndense_forward(x, wT16, u, out_features=out_channel)
    jax.block_until_ready(y16)
    assert y16.shape == (batch, out_channel)
    assert jnp.allclose(y16, y_ref, atol=5e-2, rtol=5e-2)

    # 3) Gridded path (forced via tile overrides): f32, multi-step K reduction
    #    accumulating directly into the output block, padded O, pad-free x.
    B2, F2, O2 = 256, 1024, 200
    k1, k2, k3 = jax.random.split(jax.random.PRNGKey(1), 3)
    x2 = jax.random.normal(k1, (B2, F2), dtype=jnp.float32)
    w2 = jax.random.normal(k2, (O2, F2), dtype=jnp.float32) * 0.05
    u2 = jax.random.normal(k3, (O2,), dtype=jnp.float32)
    u2 = u2 / (jnp.linalg.norm(u2) + 1e-12)
    y2_ref, u2_ref, v2_ref = reference(x2, w2, u2)

    wT2 = prepare_sndense_weight(w2)
    y2, u2_new, v2_new = sndense_forward(
        x2, wT2, u2, out_features=O2, block_m=128, block_n=128, block_k=256)
    jax.block_until_ready(y2)
    assert y2.shape == (B2, O2)
    assert jnp.allclose(y2, y2_ref, atol=5e-4, rtol=5e-4)
    assert jnp.allclose(u2_new, u2_ref, atol=1e-5, rtol=1e-5)
    assert jnp.allclose(v2_new, v2_ref, atol=1e-5, rtol=1e-5)

    # 4) Gridded path with bf16 activations/outputs (f32 scratch accumulator).
    x2b = x2.astype(jnp.bfloat16)
    wT2b = prepare_sndense_weight(w2, compute_dtype=jnp.bfloat16)
    y2b, _, _ = sndense_forward(
        x2b, wT2b, u2, out_features=O2, block_m=128, block_n=128, block_k=256)
    jax.block_until_ready(y2b)
    assert y2b.dtype == jnp.bfloat16
    assert jnp.allclose(y2b.astype(jnp.float32), y2_ref, atol=2e-1, rtol=2e-1)

    print("KERNEL_OK")
</pallas_src>

<mosaic_0001>
module attributes {stable_mosaic.version = 11 : i64} {
  func.func @_sndense_kernel_single(%arg0: memref<1x1xf32, #tpu.memory_space<smem>>, %arg1: memref<8x128xf32, #tpu.memory_space<vmem>>, %arg2: memref<128x128xf32, #tpu.memory_space<vmem>>, %arg3: memref<8x128xf32, #tpu.memory_space<vmem>>) attributes {dimension_semantics = [], scalar_prefetch = 0 : i64, scratch_operands = 0 : i64, tpu.core_type = #tpu.core_type<tc>} {
    %c0 = arith.constant 0 : index
    %c0_0 = arith.constant 0 : index
    %0 = vector.load %arg1[%c0, %c0_0] : memref<8x128xf32, #tpu.memory_space<vmem>>, vector<8x128xf32>
    %c0_1 = arith.constant 0 : index
    %c0_2 = arith.constant 0 : index
    %1 = vector.load %arg2[%c0_1, %c0_2] : memref<128x128xf32, #tpu.memory_space<vmem>>, vector<128x128xf32>
    %cst = arith.constant dense<0.000000e+00> : vector<8x128xf32>
    %2 = tpu.matmul %0, %1, %cst {dimension_numbers = #tpu.dot_dimension_numbers<[1], [0], [0], [1], [0, 0, 1, 1], [], []>} : vector<8x128xf32>, vector<128x128xf32>, vector<8x128xf32> -> vector<8x128xf32>
    %c0_3 = arith.constant 0 : index
    %c0_4 = arith.constant 0 : index
    %3 = memref.load %arg0[%c0_3, %c0_4] : memref<1x1xf32, #tpu.memory_space<smem>>
    %4 = vector.broadcast %3 : f32 to vector<8x128xf32>
    %5 = arith.mulf %2, %4 : vector<8x128xf32>
    %c0_5 = arith.constant 0 : index
    %c0_6 = arith.constant 0 : index
    %6 = vector.load %arg3[%c0_5, %c0_6] : memref<8x128xf32, #tpu.memory_space<vmem>>, vector<8x128xf32>
    tpu.vector_store %arg3[%c0_5, %c0_6], %5 {strides = array<i32>} : memref<8x128xf32, #tpu.memory_space<vmem>>, vector<8x128xf32>,
    return
  }
}

</mosaic_0001>

<llo_original>
// kernel: sndense_forward.1
$region0: #{sndense_forward.1}
  #allocation0 [shape = 'u32[]', space=smem, size = 0x4, offset = 0x4, fixed_abs, tag = 'smem constant byte address 0x4 - core index']
  #allocation1 [shape = 'u32[144,128]{1,0:T(1,128)}', space=vmem, size = 0x12000, scoped, tag = 'internal scratch']
  #allocation2 [shape = 'f32[1,1]{1,0:T(1,128)S(6)}', space=smem, size = 0x200, scoped, tag = 'scoped memory for sndense_forward.1']
  %s0 = inlined_call_operand.<no memory space> [shape: f32[1,1], index: 0, kind: input, shape index: {}]
  %s1 = inlined_call_operand.vmem [shape: f32[8,128], index: 1, kind: input, shape index: {}]
  %s2 = inlined_call_operand.vmem [shape: f32[128,128], index: 2, kind: input, shape index: {}]
  %s3 = inlined_call_operand.hbm [shape: f32[8,128], index: 3, kind: output, shape index: {}]
  %s4 = sld [smem:[#allocation0]]
  $region22: #{sndense_forward.1} parent=0
    _
  %s6 = ssub.s32 1, %s4
  %s7 = scalar_select 0, %s6, %s4
  %8 = sst [smem:[#allocation2]] %s0
  $region1: #{sndense_forward.1} parent=0
    #allocation3 [shape = 'u8[4096]{0}', space=vmem, size = 0x1000, scoped, tag = 'output window, operand 0, single buffered']
    #allocation4 [shape = 's32[1]{0}', space=sflag, size = 0x4, scoped, tag = 'scoped memory for sndense_forward.1']
    %9 = vsyncpa [#allocation4], 0
    // Predicated region
    $region2: #{sndense_forward.1} parent=1 // pred_check
      _
    $region3: #{sndense_forward.1} parent=1 // pred_check_branch
      %11 = sbr.rel (0) target = $region5
    $region4: #{sndense_forward.1} parent=1 // pred_region
      _
    $region5: #{sndense_forward.1} parent=1 // pred_fallthru
      _
    // Predicated region
    $region6: #{sndense_forward.1} parent=1 // pred_check
      _
    $region7: #{sndense_forward.1} parent=1 // pred_check_branch
      %13 = sbr.rel (0) target = $region9
    $region8: #{sndense_forward.1} parent=1 // pred_region
      _
    $region9: #{sndense_forward.1} parent=1 // pred_fallthru
      _
    // Predicated region
    $region10: #{sndense_forward.1} parent=1 // pred_check
      _
    $region11: #{sndense_forward.1} parent=1 // pred_check_branch
      %15 = sbr.rel (0) target = $region13
    $region12: #{sndense_forward.1} parent=1 // pred_region
      _
    $region13: #{sndense_forward.1} parent=1 // pred_fallthru
      _
    %v16 = vld [vmem:[%s1] sm:$0xff]
    %v17 = vld [vmem:[%s2] sm:$0xff]
    %v18 = vld [vmem:[%s2 + $0x8] sm:$0xff]
    %v19 = vld [vmem:[%s2 + $0x10] sm:$0xff]
    %v20 = vld [vmem:[%s2 + $0x18] sm:$0xff]
    %v21 = vld [vmem:[%s2 + $0x20] sm:$0xff]
    %v22 = vld [vmem:[%s2 + $0x28] sm:$0xff]
    %v23 = vld [vmem:[%s2 + $0x30] sm:$0xff]
    %v24 = vld [vmem:[%s2 + $0x38] sm:$0xff]
    %v25 = vld [vmem:[%s2 + $0x40] sm:$0xff]
    %v26 = vld [vmem:[%s2 + $0x48] sm:$0xff]
    %v27 = vld [vmem:[%s2 + $0x50] sm:$0xff]
    %v28 = vld [vmem:[%s2 + $0x58] sm:$0xff]
    %v29 = vld [vmem:[%s2 + $0x60] sm:$0xff]
    %v30 = vld [vmem:[%s2 + $0x68] sm:$0xff]
    %v31 = vld [vmem:[%s2 + $0x70] sm:$0xff]
    %v32 = vld [vmem:[%s2 + $0x78] sm:$0xff]
    %33 = vmatprep.subr.mxu0 0.0
    %34 = vmatpush1.msra.mxu0 %v17
    %35 = vmatprep.subr.mxu0 0.0
    %36 = vmatpush1.msra.mxu0 %v18
    %37 = vmatprep.subr.mxu0 0.0
    %38 = vmatpush1.msra.mxu0 %v19
    %39 = vmatprep.subr.mxu0 0.0
    %40 = vmatpush1.msra.mxu0 %v20
    %41 = vmatprep.subr.mxu0 0.0
    %42 = vmatpush1.msra.mxu0 %v21
    %43 = vmatprep.subr.mxu0 0.0
    %44 = vmatpush1.msra.mxu0 %v22
    %45 = vmatprep.subr.mxu0 0.0
    %46 = vmatpush1.msra.mxu0 %v23
    %47 = vmatprep.subr.mxu0 0.0
    %48 = vmatpush1.msra.mxu0 %v24
    %49 = vmatprep.subr.mxu0 0.0
    %50 = vmatpush1.msra.mxu0 %v25
    %51 = vmatprep.subr.mxu0 0.0
    %52 = vmatpush1.msra.mxu0 %v26
    %53 = vmatprep.subr.mxu0 0.0
    %54 = vmatpush1.msra.mxu0 %v27
    %55 = vmatprep.subr.mxu0 0.0
    %56 = vmatpush1.msra.mxu0 %v28
    %57 = vmatprep.subr.mxu0 0.0
    %58 = vmatpush1.msra.mxu0 %v29
    %59 = vmatprep.subr.mxu0 0.0
    %60 = vmatpush1.msra.mxu0 %v30
    %61 = vmatprep.subr.mxu0 0.0
    %62 = vmatpush1.msra.mxu0 %v31
    %63 = vmatprep.subr.mxu0 0.0
    %64 = vmatpush1.msra.mxu0 %v32
    %65 = vmatprep.subr.mxu0 0.0
    %66 = vmatpush1.msra.mxu0 0.0
    %67 = vmatprep.subr.mxu0 0.0
    %68 = vmatpush1.msra.mxu0 0.0
    %69 = vmatprep.subr.mxu0 0.0
    %70 = vmatpush1.msra.mxu0 0.0
    %71 = vmatprep.subr.mxu0 0.0
    %72 = vmatpush1.msra.mxu0 0.0
    %73 = vmatprep.subr.mxu0 0.0
    %74 = vmatpush1.msra.mxu0 0.0
    %75 = vmatprep.subr.mxu0 0.0
    %76 = vmatpush1.msra.mxu0 0.0
    %77 = vmatprep.subr.mxu0 0.0
    %78 = vmatpush1.msra.mxu0 0.0
    %79 = vmatprep.subr.mxu0 0.0
    %80 = vmatpush1.msra.mxu0 0.0
    %81 = vmatprep.subr.mxu0 0.0
    %82 = vmatpush1.msra.mxu0 0.0
    %83 = vmatprep.subr.mxu0 0.0
    %84 = vmatpush1.msra.mxu0 0.0
    %85 = vmatprep.subr.mxu0 0.0
    %86 = vmatpush1.msra.mxu0 0.0
    %87 = vmatprep.subr.mxu0 0.0
    %88 = vmatpush1.msra.mxu0 0.0
    %89 = vmatprep.subr.mxu0 0.0
    %90 = vmatpush1.msra.mxu0 0.0
    %91 = vmatprep.subr.mxu0 0.0
    %92 = vmatpush1.msra.mxu0 0.0
    %93 = vmatprep.subr.mxu0 0.0
    %94 = vmatpush1.msra.mxu0 0.0
    %95 = vmatprep.subr.mxu0 0.0
    %96 = vmatpush1.msra.mxu0 0.0
    %97 = vmatprep.mubr.f32.mxu0 0.0
    %98 = vmatmul.mubr.f32.gmra.mrb[0].mxu0 %v16
    %v99 = vpop.f32.mrb[0].mxu0
    %v100 = vadd.f32 0.0, %v99
    %v101 = vpop.f32.mrb[0].mxu0
    %102 = vdwg.mxu0
    %s103 = sld [smem:[#allocation2]]
    %v104 = vstv %s103
    %v105 = vmul.f32 %v100, %v104
    %106 = vst [vmem:[#allocation3] sm:$0xff] %v105
    // Predicated region
    $region14: #{sndense_forward.1} parent=1 // pred_check
      _
    $region15: #{sndense_forward.1} parent=1 // pred_check_branch
      %108 = sbr.rel (0) target = $region17
    $region16: #{sndense_forward.1} parent=1 // pred_region
      %s110 = ssub.s32 128, 128
      %111 = vsyncadd [#allocation4], %s110
      %s113 = sshll.u32 [#allocation3], 4
      %s114 = int_to_ptr.vmem [resolvable:$true] %s113
      %116 = dma.vmem_to_hbm [thread:$0]  %s114, 128, %s3, [#allocation4]
    $region17: #{sndense_forward.1} parent=1 // pred_fallthru
      _
    // Predicated region
    $region18: #{sndense_forward.1} parent=1 // pred_check
      _
    $region19: #{sndense_forward.1} parent=1 // pred_check_branch
      %118 = sbr.rel (0) target = $region21
    $region20: #{sndense_forward.1} parent=1 // pred_region
      %119 = dma.done [#allocation4], 128
    $region21: #{sndense_forward.1} parent=1 // pred_fallthru
      _
    %120 = vsyncpa [#allocation4], 1

</llo_original>
